<compile_context>
chip_gen: v6e
topology: v6e:2x2x1
jax: 0.10.0
libtpu: 0.0.40
codegen_flags: <defaults>
</compile_context>

<pallas_src>
import math
from functools import lru_cache

import numpy as np
import jax
import jax.numpy as jnp
from jax.experimental import pallas as pl
from jax.experimental.pallas import tpu as pltpu


def _round_up(x, m):
    return ((x + m - 1) // m) * m


# ---------------------------------------------------------------------------
# Pallas kernel: transposed complex channel-mix GEMM.
#
#   y = a @ w          a: (N, K) complex, w: (K, O) complex, K,O tiny (4..24)
#   computed as  y^T = w^T @ a^T  so the huge dim N sits on the lane axis:
#     inputs  ar/ai : (K, tile_n) bf16   (K = full dim, no HBM padding)
#     weights wr/wi : (O, K)      bf16   (resident across the grid)
#     outputs or/oi : (O, tile_n) f32    (lane-dense, unmasked stores)
# ---------------------------------------------------------------------------
def _cgemm_t_kernel(ar_ref, ai_ref, wr_ref, wi_ref, or_ref, oi_ref):
    ar = ar_ref[...]
    ai = ai_ref[...]
    wr = wr_ref[...]
    wi = wi_ref[...]
    or_ref[...] = (jnp.dot(wr, ar, preferred_element_type=jnp.float32)
                   - jnp.dot(wi, ai, preferred_element_type=jnp.float32))
    oi_ref[...] = (jnp.dot(wi, ar, preferred_element_type=jnp.float32)
                   + jnp.dot(wr, ai, preferred_element_type=jnp.float32))


def _choose_grid(n, desired_tile):
    """Pick (steps, tile): tile multiple of 128, padding waste bounded, and
    >=2 grid steps when cheap (v7x has 2 TensorCores on the parallel axis)."""
    steps = max(1, -(-n // desired_tile))          # cdiv
    tile = _round_up(-(-n // steps), 128)
    if steps == 1 and tile % 256 == 0:
        steps, tile = 2, tile // 2
    return steps, tile


def complex_matmul_t(a_t, w, *, tile_n=1024):
    """(K, N) complex transposed activations  x  (K, O) complex weights
    -> (O, N) complex64, i.e. (a^T @ w)^T, via one lane-dense Pallas launch."""
    k, n = a_t.shape
    o = w.shape[1]

    steps, tile = _choose_grid(n, tile_n)
    n_pad = steps * tile

    # bf16 cast BEFORE padding; only the N (lane) axis is padded, K stays true.
    pad = ((0, 0), (0, n_pad - n))
    ar = jnp.pad(jnp.real(a_t).astype(jnp.bfloat16), pad)
    ai = jnp.pad(jnp.imag(a_t).astype(jnp.bfloat16), pad)
    wr = jnp.real(w).T.astype(jnp.bfloat16)        # (O, K) -- tiny
    wi = jnp.imag(w).T.astype(jnp.bfloat16)

    out_r, out_i = pl.pallas_call(
        _cgemm_t_kernel,
        out_shape=(jax.ShapeDtypeStruct((o, n_pad), jnp.float32),
                   jax.ShapeDtypeStruct((o, n_pad), jnp.float32)),
        grid_spec=pl.GridSpec(
            grid=(steps,),
            in_specs=[
                pl.BlockSpec((k, tile), lambda i: (0, i)),
                pl.BlockSpec((k, tile), lambda i: (0, i)),
                pl.BlockSpec((o, k), lambda i: (0, 0)),   # resident weights
                pl.BlockSpec((o, k), lambda i: (0, 0)),
            ],
            out_specs=(
                pl.BlockSpec((o, tile), lambda i: (0, i)),
                pl.BlockSpec((o, tile), lambda i: (0, i)),
            ),
        ),
        compiler_params=pltpu.CompilerParams(
            # rows independent -> megacore sharding on v7x; near-neutral on
            # single-TC v5e/v6e.  Working set per step is ~0.2 MiB, so the
            # default VMEM limit is never binding on any generation.
            dimension_semantics=("parallel",),
        ),
    )(ar, ai, wr, wi)

    return (out_r[:, :n] + 1j * out_i[:, :n]).astype(jnp.complex64)


# ---------------------------------------------------------------------------
# Clebsch-Gordan coefficients (Racah formula) + diagonal CG product.
# Stand-in for gelib.DiagCGproduct (gelib is unavailable); math is standard
# Condon-Shortley CG coupling.
# TODO(synk): gelib's exact fragment ordering / normalization may differ by
#             constant factors (absorbed here by the random weights).
# ---------------------------------------------------------------------------
def _cg_coeff(l1, m1, l2, m2, l, m):
    if m1 + m2 != m or l < abs(l1 - l2) or l > l1 + l2:
        return 0.0
    if abs(m1) > l1 or abs(m2) > l2 or abs(m) > l:
        return 0.0
    f = math.factorial
    pref = ((2 * l + 1) * f(l + l1 - l2) * f(l - l1 + l2) * f(l1 + l2 - l)
            / f(l1 + l2 + l + 1))
    pref *= f(l + m) * f(l - m) * f(l1 - m1) * f(l1 + m1) * f(l2 - m2) * f(l2 + m2)
    s = 0.0
    kmin = max(0, l2 - l - m1, l1 + m2 - l)
    kmax = min(l1 + l2 - l, l1 - m1, l2 + m2)
    for kk in range(kmin, kmax + 1):
        s += ((-1) ** kk) / (f(kk) * f(l1 + l2 - l - kk) * f(l1 - m1 - kk)
                             * f(l2 + m2 - kk) * f(l - l2 + m1 + kk)
                             * f(l - l1 - m2 + kk))
    return math.sqrt(pref) * s


@lru_cache(maxsize=None)
def _cg_tensor(l1, l2, l):
    C = np.zeros((2 * l + 1, 2 * l1 + 1, 2 * l2 + 1), np.float64)
    for m in range(-l, l + 1):
        for m1 in range(-l1, l1 + 1):
            m2 = m - m1
            if abs(m2) <= l2:
                C[m + l, m1 + l1, m2 + l2] = _cg_coeff(l1, m1, l2, m2, l, m)
    return C.astype(np.float32)


def diag_cg_product(xparts, yparts, maxl, *, channels_first=False):
    """Diagonal CG product: fragment c of x.parts[l1] couples with fragment c of
    y.parts[l2]; output part l concatenates the (l1, l2) blocks along channels.
    Parts are 6-D (B, X, Y, Z, 2l+1, C).  channels_first=True emits
    (C, B, X, Y, Z, 2l+1) so the downstream Pallas GEMM needs no transpose."""
    sub_out = "cbxyzm" if channels_first else "bxyzmc"
    Lx, Ly = len(xparts) - 1, len(yparts) - 1
    blocks = [[] for _ in range(maxl + 1)]
    for l1 in range(Lx + 1):
        for l2 in range(Ly + 1):
            assert xparts[l1].shape[-1] == yparts[l2].shape[-1], \
                "diag CG product requires matching fragment counts"
            for l in range(abs(l1 - l2), min(l1 + l2, maxl) + 1):
                C = jnp.asarray(_cg_tensor(l1, l2, l), dtype=jnp.complex64)
                blk = jnp.einsum(f"mij,bxyzic,bxyzjc->{sub_out}",
                                 C, xparts[l1], yparts[l2])
                blocks[l].append(blk)
    axis = 0 if channels_first else -1
    return [jnp.concatenate(b, axis=axis) for b in blocks]


# ---------------------------------------------------------------------------
# SE3CGNonLinearity port
# ---------------------------------------------------------------------------
def _crandn(key, shape):
    kr, ki = jax.random.split(key)
    return (jax.random.normal(kr, shape, jnp.float32)
            + 1j * jax.random.normal(ki, shape, jnp.float32)).astype(jnp.complex64)


class SE3CGNonLinearityPallas:
    def __init__(self, in_channels, *, key):
        self.in_channels = ([in_channels] if not isinstance(in_channels, (list, tuple))
                            else list(in_channels))
        self.maxl = len(self.in_channels) - 1
        if any(c != self.in_channels[0] for c in self.in_channels):
            # TODO(synk): gelib's fragment-matching rule for unequal per-degree
            # channel counts in DiagCGproduct is not reproduced here.
            raise NotImplementedError("diag CG port requires equal channels per degree")

        # Mirror the PyTorch init: run the diag CG product on a dummy SO3vecArr to
        # size weights[l] = (cg_out_channels[l], in_channels[l]) complex.
        dummy = [jnp.ones((1, 1, 1, 1, 2 * l + 1, self.in_channels[l]), jnp.complex64)
                 for l in range(self.maxl + 1)]
        v = diag_cg_product(dummy, dummy, self.maxl)
        keys = jax.random.split(key, self.maxl + 1)
        self.weights = [_crandn(keys[l], (v[l].shape[-1], self.in_channels[l]))
                        for l in range(self.maxl + 1)]

    def __call__(self, x, gemm_fn=complex_matmul_t):
        parts = list(x) if isinstance(x, (list, tuple)) else [x]
        # CG features emitted channels-first: the big voxel*(2l+1) axis is already
        # the GEMM's lane axis, so no activation transpose is materialized.
        # TODO(synk): fuse this CG feature construction into the Pallas kernel.
        cg = diag_cg_product(parts, parts, self.maxl, channels_first=True)
        out = []
        for l in range(self.maxl + 1):
            p = cg[l]                                 # (C_cg, B, X, Y, Z, 2l+1)
            trail = p.shape[1:]
            a_t = p.reshape(p.shape[0], -1)           # (C_cg, N)
            y_t = gemm_fn(a_t, self.weights[l])       # (O, N) complex64
            o = self.weights[l].shape[1]
            out.append(jnp.moveaxis(y_t, 0, -1).reshape(trail + (o,)))
        return out                                    # SO3vecArr-style parts


if __name__ == "__main__":
    key = jax.random.PRNGKey(0)
    k_mod, kx0, kx1 = jax.random.split(key, 3)

    in_channels = [4, 4]                              # degrees l=0,1 with 4 ch each
    mod = SE3CGNonLinearityPallas(in_channels, key=k_mod)

    B, X, Y, Z = 2, 8, 8, 8
    x = [_crandn(kx0, (B, X, Y, Z, 1, 4)),            # l=0 part
         _crandn(kx1, (B, X, Y, Z, 3, 4))]            # l=1 part

    out = jax.block_until_ready(mod(x))               # Pallas path

    # pure-JAX reference for the GEMM (same CG glue): y^T = w^T @ a^T
    ref_gemm = lambda a_t, w: (w.T @ a_t).astype(jnp.complex64)
    out_ref = jax.block_until_ready(mod(x, gemm_fn=ref_gemm))

    assert [tuple(p.shape) for p in out] == [(2, 8, 8, 8, 1, 4), (2, 8, 8, 8, 3, 4)]
    for p, pr in zip(out, out_ref):
        rel = float(jnp.max(jnp.abs(p - pr)) / (jnp.max(jnp.abs(pr)) + 1e-6))
        assert rel < 5e-2, f"mismatch vs reference: rel err {rel}"

    print("KERNEL_OK")
</pallas_src>

<mosaic_0001>
module attributes {stable_mosaic.version = 11 : i64} {
  func.func @_cgemm_t_kernel(%arg0: i32, %arg1: memref<8x512xbf16, #tpu.memory_space<vmem>>, %arg2: memref<8x512xbf16, #tpu.memory_space<vmem>>, %arg3: memref<4x8xbf16, #tpu.memory_space<vmem>>, %arg4: memref<4x8xbf16, #tpu.memory_space<vmem>>, %arg5: memref<4x512xf32, #tpu.memory_space<vmem>>, %arg6: memref<4x512xf32, #tpu.memory_space<vmem>>) attributes {dimension_semantics = [#tpu.dimension_semantics<parallel>], iteration_bounds = array<i64: 2>, scalar_prefetch = 0 : i64, scratch_operands = 0 : i64, tpu.core_type = #tpu.core_type<tc>, window_params = [{transform_indices = @transform_0, window_bounds = array<i64: 8, 512>}, {transform_indices = @transform_1, window_bounds = array<i64: 8, 512>}, {pipeline_mode = #tpu.pipeline_mode<synchronous>, transform_indices = @transform_2, window_bounds = array<i64: 4, 8>}, {pipeline_mode = #tpu.pipeline_mode<synchronous>, transform_indices = @transform_3, window_bounds = array<i64: 4, 8>}, {transform_indices = @transform_4, window_bounds = array<i64: 4, 512>}, {transform_indices = @transform_5, window_bounds = array<i64: 4, 512>}]} {
    %c0 = arith.constant 0 : index
    %c0_0 = arith.constant 0 : index
    %0 = vector.load %arg1[%c0, %c0_0] : memref<8x512xbf16, #tpu.memory_space<vmem>>, vector<8x512xbf16>
    %c0_1 = arith.constant 0 : index
    %c0_2 = arith.constant 0 : index
    %1 = vector.load %arg2[%c0_1, %c0_2] : memref<8x512xbf16, #tpu.memory_space<vmem>>, vector<8x512xbf16>
    %c0_3 = arith.constant 0 : index
    %c0_4 = arith.constant 0 : index
    %2 = vector.load %arg3[%c0_3, %c0_4] : memref<4x8xbf16, #tpu.memory_space<vmem>>, vector<4x8xbf16>
    %c0_5 = arith.constant 0 : index
    %c0_6 = arith.constant 0 : index
    %3 = vector.load %arg4[%c0_5, %c0_6] : memref<4x8xbf16, #tpu.memory_space<vmem>>, vector<4x8xbf16>
    %cst = arith.constant dense<0.000000e+00> : vector<4x512xf32>
    %4 = tpu.matmul %2, %0, %cst {dimension_numbers = #tpu.dot_dimension_numbers<[1], [0], [0], [1], [0, 0, 1, 1], [], []>} : vector<4x8xbf16>, vector<8x512xbf16>, vector<4x512xf32> -> vector<4x512xf32>
    %cst_7 = arith.constant dense<0.000000e+00> : vector<4x512xf32>
    %5 = tpu.matmul %3, %1, %cst_7 {dimension_numbers = #tpu.dot_dimension_numbers<[1], [0], [0], [1], [0, 0, 1, 1], [], []>} : vector<4x8xbf16>, vector<8x512xbf16>, vector<4x512xf32> -> vector<4x512xf32>
    %6 = arith.subf %4, %5 : vector<4x512xf32>
    %c0_8 = arith.constant 0 : index
    %c0_9 = arith.constant 0 : index
    %7 = vector.load %arg5[%c0_8, %c0_9] : memref<4x512xf32, #tpu.memory_space<vmem>>, vector<4x512xf32>
    tpu.vector_store %arg5[%c0_8, %c0_9], %6 {strides = array<i32>} : memref<4x512xf32, #tpu.memory_space<vmem>>, vector<4x512xf32>,
    %cst_10 = arith.constant dense<0.000000e+00> : vector<4x512xf32>
    %8 = tpu.matmul %3, %0, %cst_10 {dimension_numbers = #tpu.dot_dimension_numbers<[1], [0], [0], [1], [0, 0, 1, 1], [], []>} : vector<4x8xbf16>, vector<8x512xbf16>, vector<4x512xf32> -> vector<4x512xf32>
    %cst_11 = arith.constant dense<0.000000e+00> : vector<4x512xf32>
    %9 = tpu.matmul %2, %1, %cst_11 {dimension_numbers = #tpu.dot_dimension_numbers<[1], [0], [0], [1], [0, 0, 1, 1], [], []>} : vector<4x8xbf16>, vector<8x512xbf16>, vector<4x512xf32> -> vector<4x512xf32>
    %10 = arith.addf %8, %9 : vector<4x512xf32>
    %c0_12 = arith.constant 0 : index
    %c0_13 = arith.constant 0 : index
    %11 = vector.load %arg6[%c0_12, %c0_13] : memref<4x512xf32, #tpu.memory_space<vmem>>, vector<4x512xf32>
    tpu.vector_store %arg6[%c0_12, %c0_13], %10 {strides = array<i32>} : memref<4x512xf32, #tpu.memory_space<vmem>>, vector<4x512xf32>,
    return
  }
  func.func @transform_0(%arg0: i32) -> (i32, i32) {
    %c0_i32 = arith.constant 0 : i32
    %c0_i32_0 = arith.constant 0 : i32
    return %c0_i32, %arg0 : i32, i32
  }
  func.func @transform_1(%arg0: i32) -> (i32, i32) {
    %c0_i32 = arith.constant 0 : i32
    %c0_i32_0 = arith.constant 0 : i32
    return %c0_i32, %arg0 : i32, i32
  }
  func.func @transform_2(%arg0: i32) -> (i32, i32) {
    %c0_i32 = arith.constant 0 : i32
    %c0_i32_0 = arith.constant 0 : i32
    %c0_i32_1 = arith.constant 0 : i32
    return %c0_i32, %c0_i32_0 : i32, i32
  }
  func.func @transform_3(%arg0: i32) -> (i32, i32) {
    %c0_i32 = arith.constant 0 : i32
    %c0_i32_0 = arith.constant 0 : i32
    %c0_i32_1 = arith.constant 0 : i32
    return %c0_i32, %c0_i32_0 : i32, i32
  }
  func.func @transform_4(%arg0: i32) -> (i32, i32) {
    %c0_i32 = arith.constant 0 : i32
    %c0_i32_0 = arith.constant 0 : i32
    return %c0_i32, %arg0 : i32, i32
  }
  func.func @transform_5(%arg0: i32) -> (i32, i32) {
    %c0_i32 = arith.constant 0 : i32
    %c0_i32_0 = arith.constant 0 : i32
    return %c0_i32, %arg0 : i32, i32
  }
}

</mosaic_0001>

<llo_original>
// kernel: tpu_custom_call.1
$region0: #{tpu_custom_call.1}
  #allocation0 [shape = 'u32[]', space=smem, size = 0x4, offset = 0x4, fixed_abs, tag = 'smem constant byte address 0x4 - core index']
  #allocation1 [shape = 'u32[144,128]{1,0:T(1,128)}', space=vmem, size = 0x12000, scoped, tag = 'internal scratch']
  %s0 = inlined_call_operand.hbm [shape: bf16[8,1024], index: 0, kind: input, shape index: {}]
  %s1 = inlined_call_operand.hbm [shape: bf16[8,1024], index: 1, kind: input, shape index: {}]
  %s2 = inlined_call_operand.vmem [shape: bf16[4,8], index: 2, kind: input, shape index: {}]
  %s3 = inlined_call_operand.vmem [shape: bf16[4,8], index: 3, kind: input, shape index: {}]
  %s4 = inlined_call_operand.hbm [shape: f32[4,1024], index: 4, kind: output, shape index: {0}]
  %s5 = inlined_call_operand.hbm [shape: f32[4,1024], index: 5, kind: output, shape index: {1}]
  %6 = xla_tuple %s4, %s5
  %s7 = sld [smem:[#allocation0]]
  $region65: #{tpu_custom_call.1} parent=0
    _
  %s9 = ssub.s32 1, %s7
  %s10 = scalar_select 0, %s9, %s7
  $region1: #{tpu_custom_call.1} parent=0
    #allocation2 [shape = 'u8[16384]{0}', space=vmem, size = 0x4000, scoped, tag = 'input window, operand 0']
    #allocation3 [shape = 's32[2]{0}', space=sflag, size = 0x8, scoped, tag = 'scoped memory for tpu_custom_call.1']
    #allocation4 [shape = 's32[2]{0}', space=sflag, size = 0x8, scoped, tag = 'scoped memory for tpu_custom_call.1']
    #allocation5 [shape = 'u8[16384]{0}', space=vmem, size = 0x4000, scoped, tag = 'input window, operand 1']
    #allocation6 [shape = 's32[2]{0}', space=sflag, size = 0x8, scoped, tag = 'scoped memory for tpu_custom_call.1']
    #allocation7 [shape = 'u8[16384]{0}', space=vmem, size = 0x4000, scoped, tag = 'output window, operand 0']
    #allocation8 [shape = 'u8[16384]{0}', space=vmem, size = 0x4000, scoped, tag = 'output window, operand 1']
    #allocation9 [shape = 's32[2]{0}', space=sflag, size = 0x8, scoped, tag = 'scoped memory for tpu_custom_call.1']
    %11 = vsyncpa [#allocation3], 0
    %s12 = scalar_lea.sflag [#allocation3], 1
    %13 = vsyncpa %s12, 0
    %14 = vsyncpa [#allocation6], 0
    %s15 = scalar_lea.sflag [#allocation6], 1
    %16 = vsyncpa %s15, 0
    %17 = vsyncpa [#allocation4], 0
    %s18 = scalar_lea.sflag [#allocation4], 1
    %19 = vsyncpa %s18, 0
    %20 = vsyncpa [#allocation9], 0
    %s21 = scalar_lea.sflag [#allocation9], 1
    %22 = vsyncpa %s21, 0
    loop: start=0, step=1, limit=4
    $region2: #{tpu_custom_call.1} parent=1 // loop_pre_header
      _
    $region3: #{tpu_custom_call.1} parent=1 // loop_header
      %s24 = sphi 0, %s28
      %p25 = scmp.ge.s32.totalorder %s24, 4
      %s34 = sphi 0, %s36
      %s37 = sphi 0, %s34
      %s38 = sphi 0, %s37
      %s54 = sphi 0, %s38
      %s60 = sphi 0, %s62
      %s63 = sphi 0, %s60
      %s64 = sphi 0, %s63
      %s80 = sphi 0, %s64
      %s84 = sphi 0, %s84
      %s86 = sphi 0, %s84
      %s87 = sphi 0, %s86
      %s101 = sphi 0, %s87
      %s105 = sphi 0, %s105
      %s107 = sphi 0, %s105
      %s108 = sphi 0, %s107
      %s122 = sphi 0, %s108
      %s128 = sphi 0, %s130
      %s131 = sphi 0, %s128
      %s132 = sphi 0, %s131
      %s148 = sphi 0, %s132
      %s154 = sphi 0, %s156
      %s157 = sphi 0, %s154
      %s158 = sphi 0, %s157
      %s174 = sphi 0, %s158
    $region4: #{tpu_custom_call.1} parent=1 // loop_header_branch
      %27 = sbr.rel (%p25) target = $region8
    $region5: #{tpu_custom_call.1} parent=1 // loop_body
      %s29 = ssub.s32 %s24, 1
      %s30 = ssub.s32 %s24, 2
      %s31 = sadd.s32 %s24, 1
      %s32 = ssub.s32 %s24, %s31
      %p33 = scmp.eq.s32.totalorder %s32, 0
      %s35 = sadd.s32 %s34, 1
      %s36 = scalar_select %p33, %s34, %s35
      %p39 = pneg %p33
      %p40 = scmp.eq.s32.totalorder %s24, 1
      %p41 = por %p39, %p40
      %p42 = scmp.ne.s32.totalorder %s34, %s37
      %p43 = scmp.eq.s32.totalorder %s24, 0
      %p44 = por %p42, %p43
      %p45 = scmp.ne.s32.totalorder %s34, %s37
      %p46 = scmp.eq.s32.totalorder %s29, 1
      %p47 = por %p45, %p46
      %p48 = scmp.ne.s32.totalorder %s37, %s38
      %p49 = scmp.eq.s32.totalorder %s29, 0
      %p50 = por %p48, %p49
      %p51 = scmp.ne.s32.totalorder %s37, %s38
      %p52 = scmp.eq.s32.totalorder %s30, 1
      %p53 = por %p51, %p52
      %p55 = scmp.ne.s32.totalorder %s38, %s54
      %p56 = scmp.eq.s32.totalorder %s30, 0
      %p57 = por %p55, %p56
      %s58 = ssub.s32 %s24, %s31
      %p59 = scmp.eq.s32.totalorder %s58, 0
      %s61 = sadd.s32 %s60, 1
      %s62 = scalar_select %p59, %s60, %s61
      %p65 = pneg %p59
      %p66 = scmp.eq.s32.totalorder %s24, 1
      %p67 = por %p65, %p66
      %p68 = scmp.ne.s32.totalorder %s60, %s63
      %p69 = scmp.eq.s32.totalorder %s24, 0
      %p70 = por %p68, %p69
      %p71 = scmp.ne.s32.totalorder %s60, %s63
      %p72 = scmp.eq.s32.totalorder %s29, 1
      %p73 = por %p71, %p72
      %p74 = scmp.ne.s32.totalorder %s63, %s64
      %p75 = scmp.eq.s32.totalorder %s29, 0
      %p76 = por %p74, %p75
      %p77 = scmp.ne.s32.totalorder %s63, %s64
      %p78 = scmp.eq.s32.totalorder %s30, 1
      %p79 = por %p77, %p78
      %p81 = scmp.ne.s32.totalorder %s64, %s80
      %p82 = scmp.eq.s32.totalorder %s30, 0
      %p83 = por %p81, %p82
      %s85 = sadd.s32 %s84, 1
      %p88 = scmp.eq.s32.totalorder %s24, 1
      %p89 = scmp.ne.s32.totalorder %s84, %s86
      %p90 = scmp.eq.s32.totalorder %s24, 0
      %p91 = por %p89, %p90
      %p92 = scmp.ne.s32.totalorder %s84, %s86
      %p93 = scmp.eq.s32.totalorder %s29, 1
      %p94 = por %p92, %p93
      %p95 = scmp.ne.s32.totalorder %s86, %s87
      %p96 = scmp.eq.s32.totalorder %s29, 0
      %p97 = por %p95, %p96
      %p98 = scmp.ne.s32.totalorder %s86, %s87
      %p99 = scmp.eq.s32.totalorder %s30, 1
      %p100 = por %p98, %p99
      %p102 = scmp.ne.s32.totalorder %s87, %s101
      %p103 = scmp.eq.s32.totalorder %s30, 0
      %p104 = por %p102, %p103
      %s106 = sadd.s32 %s105, 1
      %p109 = scmp.eq.s32.totalorder %s24, 1
      %p110 = scmp.ne.s32.totalorder %s105, %s107
      %p111 = scmp.eq.s32.totalorder %s24, 0
      %p112 = por %p110, %p111
      %p113 = scmp.ne.s32.totalorder %s105, %s107
      %p114 = scmp.eq.s32.totalorder %s29, 1
      %p115 = por %p113, %p114
      %p116 = scmp.ne.s32.totalorder %s107, %s108
      %p117 = scmp.eq.s32.totalorder %s29, 0
      %p118 = por %p116, %p117
      %p119 = scmp.ne.s32.totalorder %s107, %s108
      %p120 = scmp.eq.s32.totalorder %s30, 1
      %p121 = por %p119, %p120
      %p123 = scmp.ne.s32.totalorder %s108, %s122
      %p124 = scmp.eq.s32.totalorder %s30, 0
      %p125 = por %p123, %p124
      %s126 = ssub.s32 %s24, %s31
      %p127 = scmp.eq.s32.totalorder %s126, 0
      %s129 = sadd.s32 %s128, 1
      %s130 = scalar_select %p127, %s128, %s129
      %p133 = pneg %p127
      %p134 = scmp.eq.s32.totalorder %s24, 1
      %p135 = por %p133, %p134
      %p136 = scmp.ne.s32.totalorder %s128, %s131
      %p137 = scmp.eq.s32.totalorder %s24, 0
      %p138 = por %p136, %p137
      %p139 = scmp.ne.s32.totalorder %s128, %s131
      %p140 = scmp.eq.s32.totalorder %s29, 1
      %p141 = por %p139, %p140
      %p142 = scmp.ne.s32.totalorder %s131, %s132
      %p143 = scmp.eq.s32.totalorder %s29, 0
      %p144 = por %p142, %p143
      %p145 = scmp.ne.s32.totalorder %s131, %s132
      %p146 = scmp.eq.s32.totalorder %s30, 1
      %p147 = por %p145, %p146
      %p149 = scmp.ne.s32.totalorder %s132, %s148
      %p150 = scmp.eq.s32.totalorder %s30, 0
      %p151 = por %p149, %p150
      %s152 = ssub.s32 %s24, %s31
      %p153 = scmp.eq.s32.totalorder %s152, 0
      %s155 = sadd.s32 %s154, 1
      %s156 = scalar_select %p153, %s154, %s155
      %p159 = pneg %p153
      %p160 = scmp.eq.s32.totalorder %s24, 1
      %p161 = por %p159, %p160
      %p162 = scmp.ne.s32.totalorder %s154, %s157
      %p163 = scmp.eq.s32.totalorder %s24, 0
      %p164 = por %p162, %p163
      %p165 = scmp.ne.s32.totalorder %s154, %s157
      %p166 = scmp.eq.s32.totalorder %s29, 1
      %p167 = por %p165, %p166
      %p168 = scmp.ne.s32.totalorder %s157, %s158
      %p169 = scmp.eq.s32.totalorder %s29, 0
      %p170 = por %p168, %p169
      %p171 = scmp.ne.s32.totalorder %s157, %s158
      %p172 = scmp.eq.s32.totalorder %s30, 1
      %p173 = por %p171, %p172
      %p175 = scmp.ne.s32.totalorder %s158, %s174
      %p176 = scmp.eq.s32.totalorder %s30, 0
      %p177 = por %p175, %p176
      %p178 = scmp.le.s32.totalorder 1, %s24
      %p179 = scmp.lt.s32.totalorder %s24, 3
      %p180 = pnand %p178, %p179
      %p181 = pneg %p180
      // Predicated region
      $region9: #{tpu_custom_call.1} parent=5 // pred_check
        _
      $region10: #{tpu_custom_call.1} parent=5 // pred_check_branch
        %183 = sbr.rel (%p180) target = $region12
      $region11: #{tpu_custom_call.1} parent=5 // pred_region
        %s184 = ssub.s32 %s24, 1
        // Predicated region
        $region13: #{tpu_custom_call.1} parent=11 // pred_check
          %p185 = pneg %p97
        $region14: #{tpu_custom_call.1} parent=11 // pred_check_branch
          %187 = sbr.rel (%p185) target = $region16
        $region15: #{tpu_custom_call.1} parent=11 // pred_region
          _
        $region16: #{tpu_custom_call.1} parent=11 // pred_fallthru
          _
        // Predicated region
        $region17: #{tpu_custom_call.1} parent=11 // pred_check
          %p188 = pneg %p118
        $region18: #{tpu_custom_call.1} parent=11 // pred_check_branch
          %190 = sbr.rel (%p188) target = $region20
        $region19: #{tpu_custom_call.1} parent=11 // pred_region
          _
        $region20: #{tpu_custom_call.1} parent=11 // pred_fallthru
          _
      $region12: #{tpu_custom_call.1} parent=5 // pred_fallthru
        _
      %p191 = scmp.lt.s32.totalorder %s24, 2
      // Predicated region
      $region21: #{tpu_custom_call.1} parent=5 // pred_check
        %p192 = pneg %p191
      $region22: #{tpu_custom_call.1} parent=5 // pred_check_branch
        %194 = sbr.rel (%p192) target = $region24
      $region23: #{tpu_custom_call.1} parent=5 // pred_region
        // Predicated region
        $region25: #{tpu_custom_call.1} parent=23 // pred_check
          %p195 = pneg %p44
        $region26: #{tpu_custom_call.1} parent=23 // pred_check_branch
          %197 = sbr.rel (%p195) target = $region28
        $region27: #{tpu_custom_call.1} parent=23 // pred_region
          %s198 = sand.u32 %s34, 1
          %s199 = scalar_lea.sflag [#allocation3], %s198
          %s200 = sand.u32 %s34, 1
          %s201 = smul.addr %s200, 16
          %s202 = scalar_lea.vmem [#allocation2], %s201
          %s203 = smul.u32 4, %s24
          %s205 = ssub.s32 256, 256
          %206 = vsyncadd %s199, %s205
          %s207 = smul.addr %s203, 64
          %s208 = scalar_lea.hbm %s0, %s207
          %s210 = sshll.u32 %s202, 4
          %s211 = int_to_ptr.vmem [resolvable:$true] %s210
          %213 = dma.hbm_to_vmem [thread:$0]  %s208, 256, %s211, %s199
        $region28: #{tpu_custom_call.1} parent=23 // pred_fallthru
          _
        // Predicated region
        $region29: #{tpu_custom_call.1} parent=23 // pred_check
          %p214 = pneg %p70
        $region30: #{tpu_custom_call.1} parent=23 // pred_check_branch
          %216 = sbr.rel (%p214) target = $region32
        $region31: #{tpu_custom_call.1} parent=23 // pred_region
          %s217 = sand.u32 %s60, 1
          %s218 = scalar_lea.sflag [#allocation6], %s217
          %s219 = sand.u32 %s60, 1
          %s220 = smul.addr %s219, 16
          %s221 = scalar_lea.vmem [#allocation5], %s220
          %s222 = smul.u32 4, %s24
          %s224 = ssub.s32 256, 256
          %225 = vsyncadd %s218, %s224
          %s226 = smul.addr %s222, 64
          %s227 = scalar_lea.hbm %s1, %s226
          %s229 = sshll.u32 %s221, 4
          %s230 = int_to_ptr.vmem [resolvable:$true] %s229
          %232 = dma.hbm_to_vmem [thread:$0]  %s227, 256, %s230, %s218
        $region32: #{tpu_custom_call.1} parent=23 // pred_fallthru
          _
      $region24: #{tpu_custom_call.1} parent=5 // pred_fallthru
        _
      %p233 = scmp.le.s32.totalorder 1, %s24
      %p234 = scmp.lt.s32.totalorder %s24, 3
      %p235 = pnand %p233, %p234
      %p236 = pneg %p235
      // Predicated region
      $region33: #{tpu_custom_call.1} parent=5 // pred_check
        _
      $region34: #{tpu_custom_call.1} parent=5 // pred_check_branch
        %238 = sbr.rel (%p235) target = $region36
      $region35: #{tpu_custom_call.1} parent=5 // pred_region
        %s239 = ssub.s32 %s24, 1
        %s240 = sand.u32 %s37, 1
        %s241 = scalar_lea.sflag [#allocation3], %s240
        %s242 = sand.u32 %s37, 1
        %s243 = smul.addr %s242, 16
        %s244 = scalar_lea.vmem [#allocation2], %s243
        // Predicated region
        $region37: #{tpu_custom_call.1} parent=35 // pred_check
          %p245 = pneg %p50
        $region38: #{tpu_custom_call.1} parent=35 // pred_check_branch
          %247 = sbr.rel (%p245) target = $region40
        $region39: #{tpu_custom_call.1} parent=35 // pred_region
          %248 = dma.done %s241, 256
        $region40: #{tpu_custom_call.1} parent=35 // pred_fallthru
          _
        %s249 = sand.u32 %s63, 1
        %s250 = scalar_lea.sflag [#allocation6], %s249
        %s251 = sand.u32 %s63, 1
        %s252 = smul.addr %s251, 16
        %s253 = scalar_lea.vmem [#allocation5], %s252
        // Predicated region
        $region41: #{tpu_custom_call.1} parent=35 // pred_check
          %p254 = pneg %p76
        $region42: #{tpu_custom_call.1} parent=35 // pred_check_branch
          %256 = sbr.rel (%p254) target = $region44
        $region43: #{tpu_custom_call.1} parent=35 // pred_region
          %257 = dma.done %s250, 256
        $region44: #{tpu_custom_call.1} parent=35 // pred_fallthru
          _
        %s258 = sand.u32 %s37, 1
        %s259 = scalar_lea.sflag [#allocation3], %s258
        %s260 = sand.u32 %s37, 1
        %s261 = smul.addr %s260, 16
        %s262 = scalar_lea.vmem [#allocation2], %s261
        %p263 = pneg %p50
        %p264 = pneg %p47
        %s265 = sand.u32 %s63, 1
        %s266 = scalar_lea.sflag [#allocation6], %s265
        %s267 = sand.u32 %s63, 1
        %s268 = smul.addr %s267, 16
        %s269 = scalar_lea.vmem [#allocation5], %s268
        %p270 = pneg %p76
        %p271 = pneg %p73
        %p272 = pneg %p97
        %p273 = pneg %p94
        %p274 = pneg %p118
        %p275 = pneg %p115
        %p276 = pneg %p144
        %p277 = pneg %p141
        %s278 = sand.u32 %s131, 1
        %s279 = scalar_lea.sflag [#allocation4], %s278
        %s280 = sand.u32 %s131, 1
        %s281 = smul.addr %s280, 16
        %s282 = scalar_lea.vmem [#allocation7], %s281
        %p283 = pneg %p170
        %p284 = pneg %p167
        %s285 = sand.u32 %s157, 1
        %s286 = scalar_lea.sflag [#allocation9], %s285
        %s287 = sand.u32 %s157, 1
        %s288 = smul.addr %s287, 16
        %s289 = scalar_lea.vmem [#allocation8], %s288
        %s290 = smul.u32 4, %s29
        %s291 = smul.u32 4, %s29
        %s292 = smul.u32 4, %s29
        %s293 = smul.u32 4, %s29
        %v295 = vld [vmem:[%s244] sm:$0xff]
        %v296 = vld [vmem:[%s244 + $0x8] sm:$0xff]
        %v297 = vld [vmem:[%s253] sm:$0xff]
        %v298 = vld [vmem:[%s253 + $0x8] sm:$0xff]
        %v299 = vld [vmem:[%s2] sm:$0x3]
        %v300 = vld [vmem:[%s3] sm:$0x3]
        %v303 = vunpack.c.l.b16 %v295
        %v304 = vunpack.c.h.b16 %v295
        %v305 = vunpack.c.l.b16 %v296
        %v306 = vunpack.c.h.b16 %v296
        %v307 = vpack.c.b16 %v303, %v303
        %v308 = vpack.c.b16 %v304, %v304
        %v309 = vpack.c.b16 %v305, %v305
        %v310 = vpack.c.b16 %v306, %v306
        %vm311 = vcmask 64512
        %v313 = vsel %vm311, %v299, 0
        %vm315 = vcmask 1043456
        %v317 = vsel %vm315, %v307, 0
        %v320 = vsel %vm315, %v308, 0
        %v323 = vsel %vm315, %v309, 0
        %v326 = vsel %vm315, %v310, 0
        %328 = vmatprep.subr.bf16.mxu0 0
        %329 = vmatpush1.bf16.msra.mxu0 0
        %330 = vmatprep.subr.bf16.mxu0 0
        %331 = vmatpush1.bf16.msra.mxu0 0
        %332 = vmatprep.subr.bf16.mxu0 0
        %333 = vmatpush1.bf16.msra.mxu0 0
        %334 = vmatprep.subr.bf16.mxu0 0
        %335 = vmatpush1.bf16.msra.mxu0 0
        %336 = vmatprep.subr.bf16.mxu0 0
        %337 = vmatpush1.bf16.msra.mxu0 0
        %338 = vmatprep.subr.bf16.mxu0 0
        %339 = vmatpush1.bf16.msra.mxu0 0
        %340 = vmatprep.subr.bf16.mxu0 0
        %341 = vmatpush1.bf16.msra.mxu0 0
        %342 = vmatprep.subr.bf16.mxu0 %v320
        %343 = vmatpush1.bf16.msra.mxu0 %v317
        %344 = vmatprep.subr.bf16.mxu0 0
        %345 = vmatpush2.bf16.msra.mxu0 0
        %346 = vmatprep.subr.bf16.mxu0 0
        %347 = vmatpush2.bf16.msra.mxu0 0
        %348 = vmatprep.subr.bf16.mxu0 0
        %349 = vmatpush2.bf16.msra.mxu0 0
        %350 = vmatprep.subr.bf16.mxu0 0
        %351 = vmatpush2.bf16.msra.mxu0 0
        %352 = vmatprep.subr.bf16.mxu0 0
        %353 = vmatpush2.bf16.msra.mxu0 0
        %354 = vmatprep.subr.bf16.mxu0 0
        %355 = vmatpush2.bf16.msra.mxu0 0
        %356 = vmatprep.subr.bf16.mxu0 0
        %357 = vmatpush2.bf16.msra.mxu0 0
        %358 = vmatprep.subr.bf16.mxu0 0
        %359 = vmatpush2.bf16.msra.mxu0 0
        %360 = vmatprep.mubr.bf16.mxu0 0
        %361 = vmatmul.mubr.bf16.gmra.mxu0 %v313
        %v362 = vpop.f32.mrf.mxu0
        %v363 = vadd.f32 0.0, %v362
        %v364 = vpop.f32.mrf.mxu0
        %v365 = vadd.f32 0.0, %v364
        %v366 = vpop.f32.mrf.mxu0
        %v367 = vpop.f32.mrf.mxu0
        %368 = vdwg.mxu0
        %369 = vmatprep.subr.bf16.mxu0 0
        %370 = vmatpush1.bf16.msra.mxu0 0
        %371 = vmatprep.subr.bf16.mxu0 0
        %372 = vmatpush1.bf16.msra.mxu0 0
        %373 = vmatprep.subr.bf16.mxu0 0
        %374 = vmatpush1.bf16.msra.mxu0 0
        %375 = vmatprep.subr.bf16.mxu0 0
        %376 = vmatpush1.bf16.msra.mxu0 0
        %377 = vmatprep.subr.bf16.mxu0 0
        %378 = vmatpush1.bf16.msra.mxu0 0
        %379 = vmatprep.subr.bf16.mxu0 0
        %380 = vmatpush1.bf16.msra.mxu0 0
        %381 = vmatprep.subr.bf16.mxu0 0
        %382 = vmatpush1.bf16.msra.mxu0 0
        %383 = vmatprep.subr.bf16.mxu0 %v326
        %384 = vmatpush1.bf16.msra.mxu0 %v323
        %385 = vmatprep.subr.bf16.mxu0 0
        %386 = vmatpush2.bf16.msra.mxu0 0
        %387 = vmatprep.subr.bf16.mxu0 0
        %388 = vmatpush2.bf16.msra.mxu0 0
        %389 = vmatprep.subr.bf16.mxu0 0
        %390 = vmatpush2.bf16.msra.mxu0 0
        %391 = vmatprep.subr.bf16.mxu0 0
        %392 = vmatpush2.bf16.msra.mxu0 0
        %393 = vmatprep.subr.bf16.mxu0 0
        %394 = vmatpush2.bf16.msra.mxu0 0
        %395 = vmatprep.subr.bf16.mxu0 0
        %396 = vmatpush2.bf16.msra.mxu0 0
        %397 = vmatprep.subr.bf16.mxu0 0
        %398 = vmatpush2.bf16.msra.mxu0 0
        %399 = vmatprep.subr.bf16.mxu0 0
        %400 = vmatpush2.bf16.msra.mxu0 0
        %401 = vmatprep.mubr.bf16.mxu0 0
        %402 = vmatmul.mubr.bf16.gmra.mxu0 %v313
        %v403 = vpop.f32.mrf.mxu0
        %v404 = vadd.f32 0.0, %v403
        %v405 = vpop.f32.mrf.mxu0
        %v406 = vadd.f32 0.0, %v405
        %v407 = vpop.f32.mrf.mxu0
        %v408 = vpop.f32.mrf.mxu0
        %409 = vdwg.mxu0
        %v412 = vunpack.c.l.b16 %v297
        %v413 = vunpack.c.h.b16 %v297
        %v414 = vunpack.c.l.b16 %v298
        %v415 = vunpack.c.h.b16 %v298
        %v416 = vpack.c.b16 %v412, %v412
        %v417 = vpack.c.b16 %v413, %v413
        %v418 = vpack.c.b16 %v414, %v414
        %v419 = vpack.c.b16 %v415, %v415
        %v421 = vsel %vm311, %v300, 0
        %v424 = vsel %vm315, %v416, 0
        %v427 = vsel %vm315, %v417, 0
        %v430 = vsel %vm315, %v418, 0
        %v433 = vsel %vm315, %v419, 0
        %435 = vmatprep.subr.bf16.mxu0 0
        %436 = vmatpush1.bf16.msra.mxu0 0
        %437 = vmatprep.subr.bf16.mxu0 0
        %438 = vmatpush1.bf16.msra.mxu0 0
        %439 = vmatprep.subr.bf16.mxu0 0
        %440 = vmatpush1.bf16.msra.mxu0 0
        %441 = vmatprep.subr.bf16.mxu0 0
        %442 = vmatpush1.bf16.msra.mxu0 0
        %443 = vmatprep.subr.bf16.mxu0 0
        %444 = vmatpush1.bf16.msra.mxu0 0
        %445 = vmatprep.subr.bf16.mxu0 0
        %446 = vmatpush1.bf16.msra.mxu0 0
        %447 = vmatprep.subr.bf16.mxu0 0
        %448 = vmatpush1.bf16.msra.mxu0 0
        %449 = vmatprep.subr.bf16.mxu0 %v427
        %450 = vmatpush1.bf16.msra.mxu0 %v424
        %451 = vmatprep.subr.bf16.mxu0 0
        %452 = vmatpush2.bf16.msra.mxu0 0
        %453 = vmatprep.subr.bf16.mxu0 0
        %454 = vmatpush2.bf16.msra.mxu0 0
        %455 = vmatprep.subr.bf16.mxu0 0
        %456 = vmatpush2.bf16.msra.mxu0 0
        %457 = vmatprep.subr.bf16.mxu0 0
        %458 = vmatpush2.bf16.msra.mxu0 0
        %459 = vmatprep.subr.bf16.mxu0 0
        %460 = vmatpush2.bf16.msra.mxu0 0
        %461 = vmatprep.subr.bf16.mxu0 0
        %462 = vmatpush2.bf16.msra.mxu0 0
        %463 = vmatprep.subr.bf16.mxu0 0
        %464 = vmatpush2.bf16.msra.mxu0 0
        %465 = vmatprep.subr.bf16.mxu0 0
        %466 = vmatpush2.bf16.msra.mxu0 0
        %467 = vmatprep.mubr.bf16.mxu0 0
        %468 = vmatmul.mubr.bf16.gmra.mxu0 %v421
        %v469 = vpop.f32.mrf.mxu0
        %v470 = vadd.f32 0.0, %v469
        %v471 = vpop.f32.mrf.mxu0
        %v472 = vadd.f32 0.0, %v471
        %v473 = vpop.f32.mrf.mxu0
        %v474 = vpop.f32.mrf.mxu0
        %475 = vdwg.mxu0
        %476 = vmatprep.subr.bf16.mxu0 0
        %477 = vmatpush1.bf16.msra.mxu0 0
        %478 = vmatprep.subr.bf16.mxu0 0
        %479 = vmatpush1.bf16.msra.mxu0 0
        %480 = vmatprep.subr.bf16.mxu0 0
        %481 = vmatpush1.bf16.msra.mxu0 0
        %482 = vmatprep.subr.bf16.mxu0 0
        %483 = vmatpush1.bf16.msra.mxu0 0
        %484 = vmatprep.subr.bf16.mxu0 0
        %485 = vmatpush1.bf16.msra.mxu0 0
        %486 = vmatprep.subr.bf16.mxu0 0
        %487 = vmatpush1.bf16.msra.mxu0 0
        %488 = vmatprep.subr.bf16.mxu0 0
        %489 = vmatpush1.bf16.msra.mxu0 0
        %490 = vmatprep.subr.bf16.mxu0 %v433
        %491 = vmatpush1.bf16.msra.mxu0 %v430
        %492 = vmatprep.subr.bf16.mxu0 0
        %493 = vmatpush2.bf16.msra.mxu0 0
        %494 = vmatprep.subr.bf16.mxu0 0
        %495 = vmatpush2.bf16.msra.mxu0 0
        %496 = vmatprep.subr.bf16.mxu0 0
        %497 = vmatpush2.bf16.msra.mxu0 0
        %498 = vmatprep.subr.bf16.mxu0 0
        %499 = vmatpush2.bf16.msra.mxu0 0
        %500 = vmatprep.subr.bf16.mxu0 0
        %501 = vmatpush2.bf16.msra.mxu0 0
        %502 = vmatprep.subr.bf16.mxu0 0
        %503 = vmatpush2.bf16.msra.mxu0 0
        %504 = vmatprep.subr.bf16.mxu0 0
        %505 = vmatpush2.bf16.msra.mxu0 0
        %506 = vmatprep.subr.bf16.mxu0 0
        %507 = vmatpush2.bf16.msra.mxu0 0
        %508 = vmatprep.mubr.bf16.mxu0 0
        %509 = vmatmul.mubr.bf16.gmra.mxu0 %v421
        %v510 = vpop.f32.mrf.mxu0
        %v511 = vadd.f32 0.0, %v510
        %v512 = vpop.f32.mrf.mxu0
        %v513 = vadd.f32 0.0, %v512
        %v514 = vpop.f32.mrf.mxu0
        %v515 = vpop.f32.mrf.mxu0
        %516 = vdwg.mxu0
        %v517 = vsub.f32 %v363, %v470
        %v518 = vsub.f32 %v365, %v472
        %v519 = vsub.f32 %v404, %v511
        %v520 = vsub.f32 %v406, %v513
        %v525 = vcombine.low %v517, %v518
        %v526 = vcombine.low %v519, %v520
        %529 = vst [vmem:[%s282] sm:$0xff] %v525
        %530 = vst [vmem:[%s282 + $0x8] sm:$0xff] %v526
        %531 = vmatprep.subr.bf16.mxu0 0
        %532 = vmatpush1.bf16.msra.mxu0 0
        %533 = vmatprep.subr.bf16.mxu0 0
        %534 = vmatpush1.bf16.msra.mxu0 0
        %535 = vmatprep.subr.bf16.mxu0 0
        %536 = vmatpush1.bf16.msra.mxu0 0
        %537 = vmatprep.subr.bf16.mxu0 0
        %538 = vmatpush1.bf16.msra.mxu0 0
        %539 = vmatprep.subr.bf16.mxu0 0
        %540 = vmatpush1.bf16.msra.mxu0 0
        %541 = vmatprep.subr.bf16.mxu0 0
        %542 = vmatpush1.bf16.msra.mxu0 0
        %543 = vmatprep.subr.bf16.mxu0 0
        %544 = vmatpush1.bf16.msra.mxu0 0
        %545 = vmatprep.subr.bf16.mxu0 %v427
        %546 = vmatpush1.bf16.msra.mxu0 %v424
        %547 = vmatprep.subr.bf16.mxu0 0
        %548 = vmatpush2.bf16.msra.mxu0 0
        %549 = vmatprep.subr.bf16.mxu0 0
        %550 = vmatpush2.bf16.msra.mxu0 0
        %551 = vmatprep.subr.bf16.mxu0 0
        %552 = vmatpush2.bf16.msra.mxu0 0
        %553 = vmatprep.subr.bf16.mxu0 0
        %554 = vmatpush2.bf16.msra.mxu0 0
        %555 = vmatprep.subr.bf16.mxu0 0
        %556 = vmatpush2.bf16.msra.mxu0 0
        %557 = vmatprep.subr.bf16.mxu0 0
        %558 = vmatpush2.bf16.msra.mxu0 0
        %559 = vmatprep.subr.bf16.mxu0 0
        %560 = vmatpush2.bf16.msra.mxu0 0
        %561 = vmatprep.subr.bf16.mxu0 0
        %562 = vmatpush2.bf16.msra.mxu0 0
        %563 = vmatprep.mubr.bf16.mxu0 0
        %564 = vmatmul.mubr.bf16.gmra.mxu0 %v313
        %v565 = vpop.f32.mrf.mxu0
        %v566 = vadd.f32 0.0, %v565
        %v567 = vpop.f32.mrf.mxu0
        %v568 = vadd.f32 0.0, %v567
        %v569 = vpop.f32.mrf.mxu0
        %v570 = vpop.f32.mrf.mxu0
        %571 = vdwg.mxu0
        %572 = vmatprep.subr.bf16.mxu0 0
        %573 = vmatpush1.bf16.msra.mxu0 0
        %574 = vmatprep.subr.bf16.mxu0 0
        %575 = vmatpush1.bf16.msra.mxu0 0
        %576 = vmatprep.subr.bf16.mxu0 0
        %577 = vmatpush1.bf16.msra.mxu0 0
        %578 = vmatprep.subr.bf16.mxu0 0
        %579 = vmatpush1.bf16.msra.mxu0 0
        %580 = vmatprep.subr.bf16.mxu0 0
        %581 = vmatpush1.bf16.msra.mxu0 0
        %582 = vmatprep.subr.bf16.mxu0 0
        %583 = vmatpush1.bf16.msra.mxu0 0
        %584 = vmatprep.subr.bf16.mxu0 0
        %585 = vmatpush1.bf16.msra.mxu0 0
        %586 = vmatprep.subr.bf16.mxu0 %v433
        %587 = vmatpush1.bf16.msra.mxu0 %v430
        %588 = vmatprep.subr.bf16.mxu0 0
        %589 = vmatpush2.bf16.msra.mxu0 0
        %590 = vmatprep.subr.bf16.mxu0 0
        %591 = vmatpush2.bf16.msra.mxu0 0
        %592 = vmatprep.subr.bf16.mxu0 0
        %593 = vmatpush2.bf16.msra.mxu0 0
        %594 = vmatprep.subr.bf16.mxu0 0
        %595 = vmatpush2.bf16.msra.mxu0 0
        %596 = vmatprep.subr.bf16.mxu0 0
        %597 = vmatpush2.bf16.msra.mxu0 0
        %598 = vmatprep.subr.bf16.mxu0 0
        %599 = vmatpush2.bf16.msra.mxu0 0
        %600 = vmatprep.subr.bf16.mxu0 0
        %601 = vmatpush2.bf16.msra.mxu0 0
        %602 = vmatprep.subr.bf16.mxu0 0
        %603 = vmatpush2.bf16.msra.mxu0 0
        %604 = vmatprep.mubr.bf16.mxu0 0
        %605 = vmatmul.mubr.bf16.gmra.mxu0 %v313
        %v606 = vpop.f32.mrf.mxu0
        %v607 = vadd.f32 0.0, %v606
        %v608 = vpop.f32.mrf.mxu0
        %v609 = vadd.f32 0.0, %v608
        %v610 = vpop.f32.mrf.mxu0
        %v611 = vpop.f32.mrf.mxu0
        %612 = vdwg.mxu0
        %613 = vmatprep.subr.bf16.mxu0 0
        %614 = vmatpush1.bf16.msra.mxu0 0
        %615 = vmatprep.subr.bf16.mxu0 0
        %616 = vmatpush1.bf16.msra.mxu0 0
        %617 = vmatprep.subr.bf16.mxu0 0
        %618 = vmatpush1.bf16.msra.mxu0 0
        %619 = vmatprep.subr.bf16.mxu0 0
        %620 = vmatpush1.bf16.msra.mxu0 0
        %621 = vmatprep.subr.bf16.mxu0 0
        %622 = vmatpush1.bf16.msra.mxu0 0
        %623 = vmatprep.subr.bf16.mxu0 0
        %624 = vmatpush1.bf16.msra.mxu0 0
        %625 = vmatprep.subr.bf16.mxu0 0
        %626 = vmatpush1.bf16.msra.mxu0 0
        %627 = vmatprep.subr.bf16.mxu0 %v320
        %628 = vmatpush1.bf16.msra.mxu0 %v317
        %629 = vmatprep.subr.bf16.mxu0 0
        %630 = vmatpush2.bf16.msra.mxu0 0
        %631 = vmatprep.subr.bf16.mxu0 0
        %632 = vmatpush2.bf16.msra.mxu0 0
        %633 = vmatprep.subr.bf16.mxu0 0
        %634 = vmatpush2.bf16.msra.mxu0 0
        %635 = vmatprep.subr.bf16.mxu0 0
        %636 = vmatpush2.bf16.msra.mxu0 0
        %637 = vmatprep.subr.bf16.mxu0 0
        %638 = vmatpush2.bf16.msra.mxu0 0
        %639 = vmatprep.subr.bf16.mxu0 0
        %640 = vmatpush2.bf16.msra.mxu0 0
        %641 = vmatprep.subr.bf16.mxu0 0
        %642 = vmatpush2.bf16.msra.mxu0 0
        %643 = vmatprep.subr.bf16.mxu0 0
        %644 = vmatpush2.bf16.msra.mxu0 0
        %645 = vmatprep.mubr.bf16.mxu0 0
        %646 = vmatmul.mubr.bf16.gmra.mxu0 %v421
        %v647 = vpop.f32.mrf.mxu0
        %v648 = vadd.f32 %v566, %v647
        %v649 = vpop.f32.mrf.mxu0
        %v650 = vadd.f32 %v568, %v649
        %v651 = vpop.f32.mrf.mxu0
        %v652 = vpop.f32.mrf.mxu0
        %653 = vdwg.mxu0
        %654 = vmatprep.subr.bf16.mxu0 0
        %655 = vmatpush1.bf16.msra.mxu0 0
        %656 = vmatprep.subr.bf16.mxu0 0
        %657 = vmatpush1.bf16.msra.mxu0 0
        %658 = vmatprep.subr.bf16.mxu0 0
        %659 = vmatpush1.bf16.msra.mxu0 0
        %660 = vmatprep.subr.bf16.mxu0 0
        %661 = vmatpush1.bf16.msra.mxu0 0
        %662 = vmatprep.subr.bf16.mxu0 0
        %663 = vmatpush1.bf16.msra.mxu0 0
        %664 = vmatprep.subr.bf16.mxu0 0
        %665 = vmatpush1.bf16.msra.mxu0 0
        %666 = vmatprep.subr.bf16.mxu0 0
        %667 = vmatpush1.bf16.msra.mxu0 0
        %668 = vmatprep.subr.bf16.mxu0 %v326
        %669 = vmatpush1.bf16.msra.mxu0 %v323
        %670 = vmatprep.subr.bf16.mxu0 0
        %671 = vmatpush2.bf16.msra.mxu0 0
        %672 = vmatprep.subr.bf16.mxu0 0
        %673 = vmatpush2.bf16.msra.mxu0 0
        %674 = vmatprep.subr.bf16.mxu0 0
        %675 = vmatpush2.bf16.msra.mxu0 0
        %676 = vmatprep.subr.bf16.mxu0 0
        %677 = vmatpush2.bf16.msra.mxu0 0
        %678 = vmatprep.subr.bf16.mxu0 0
        %679 = vmatpush2.bf16.msra.mxu0 0
        %680 = vmatprep.subr.bf16.mxu0 0
        %681 = vmatpush2.bf16.msra.mxu0 0
        %682 = vmatprep.subr.bf16.mxu0 0
        %683 = vmatpush2.bf16.msra.mxu0 0
        %684 = vmatprep.subr.bf16.mxu0 0
        %685 = vmatpush2.bf16.msra.mxu0 0
        %686 = vmatprep.mubr.bf16.mxu0 0
        %687 = vmatmul.mubr.bf16.gmra.mxu0 %v421
        %v688 = vpop.f32.mrf.mxu0
        %v689 = vadd.f32 %v607, %v688
        %v690 = vpop.f32.mrf.mxu0
        %v691 = vadd.f32 %v609, %v690
        %v692 = vpop.f32.mrf.mxu0
        %v693 = vpop.f32.mrf.mxu0
        %694 = vdwg.mxu0
        %v699 = vcombine.low %v648, %v650
        %v700 = vcombine.low %v689, %v691
        %703 = vst [vmem:[%s289] sm:$0xff] %v699
        %704 = vst [vmem:[%s289 + $0x8] sm:$0xff] %v700
        %s705 = sand.u32 %s131, 1
        %s706 = scalar_lea.sflag [#allocation4], %s705
        %s707 = sand.u32 %s131, 1
        %s708 = smul.addr %s707, 16
        %s709 = scalar_lea.vmem [#allocation7], %s708
        %s710 = sand.u32 %s157, 1
        %s711 = scalar_lea.sflag [#allocation9], %s710
        %s712 = sand.u32 %s157, 1
        %s713 = smul.addr %s712, 16
        %s714 = scalar_lea.vmem [#allocation8], %s713
        // Predicated region
        $region45: #{tpu_custom_call.1} parent=35 // pred_check
          %p715 = pneg %p141
        $region46: #{tpu_custom_call.1} parent=35 // pred_check_branch
          %717 = sbr.rel (%p715) target = $region48
        $region47: #{tpu_custom_call.1} parent=35 // pred_region
          %s718 = smul.u32 4, %s29
          %s720 = ssub.s32 256, 256
          %721 = vsyncadd %s706, %s720
          %s722 = smul.addr %s718, 64
          %s723 = scalar_lea.hbm %s4, %s722
          %s725 = sshll.u32 %s709, 4
          %s726 = int_to_ptr.vmem [resolvable:$true] %s725
          %728 = dma.vmem_to_hbm [thread:$0]  %s726, 256, %s723, %s706
        $region48: #{tpu_custom_call.1} parent=35 // pred_fallthru
          _
        // Predicated region
        $region49: #{tpu_custom_call.1} parent=35 // pred_check
          %p729 = pneg %p167
        $region50: #{tpu_custom_call.1} parent=35 // pred_check_branch
          %731 = sbr.rel (%p729) target = $region52
        $region51: #{tpu_custom_call.1} parent=35 // pred_region
          %s732 = smul.u32 4, %s29
          %s734 = ssub.s32 256, 256
          %735 = vsyncadd %s711, %s734
          %s736 = smul.addr %s732, 64
          %s737 = scalar_lea.hbm %s5, %s736
          %s739 = sshll.u32 %s714, 4
          %s740 = int_to_ptr.vmem [resolvable:$true] %s739
          %742 = dma.vmem_to_hbm [thread:$0]  %s740, 256, %s737, %s711
        $region52: #{tpu_custom_call.1} parent=35 // pred_fallthru
          _
      $region36: #{tpu_custom_call.1} parent=5 // pred_fallthru
        _
      %p743 = scmp.le.s32.totalorder 2, %s24
      // Predicated region
      $region53: #{tpu_custom_call.1} parent=5 // pred_check
        %p744 = pneg %p743
      $region54: #{tpu_custom_call.1} parent=5 // pred_check_branch
        %746 = sbr.rel (%p744) target = $region56
      $region55: #{tpu_custom_call.1} parent=5 // pred_region
        %s747 = ssub.s32 %s24, 2
        // Predicated region
        $region57: #{tpu_custom_call.1} parent=55 // pred_check
          %p748 = pneg %p147
        $region58: #{tpu_custom_call.1} parent=55 // pred_check_branch
          %750 = sbr.rel (%p748) target = $region60
        $region59: #{tpu_custom_call.1} parent=55 // pred_region
          %s751 = sand.u32 %s132, 1
          %s752 = scalar_lea.sflag [#allocation4], %s751
          %s753 = sand.u32 %s132, 1
          %s754 = smul.addr %s753, 16
          %s755 = scalar_lea.vmem [#allocation7], %s754
          %756 = dma.done %s752, 256
        $region60: #{tpu_custom_call.1} parent=55 // pred_fallthru
          _
        // Predicated region
        $region61: #{tpu_custom_call.1} parent=55 // pred_check
          %p757 = pneg %p173
        $region62: #{tpu_custom_call.1} parent=55 // pred_check_branch
          %759 = sbr.rel (%p757) target = $region64
        $region63: #{tpu_custom_call.1} parent=55 // pred_region
          %s760 = sand.u32 %s158, 1
          %s761 = scalar_lea.sflag [#allocation9], %s760
          %s762 = sand.u32 %s158, 1
          %s763 = smul.addr %s762, 16
          %s764 = scalar_lea.vmem [#allocation8], %s763
          %765 = dma.done %s761, 256
        $region64: #{tpu_custom_call.1} parent=55 // pred_fallthru
          _
      $region56: #{tpu_custom_call.1} parent=5 // pred_fallthru
        _
    $region6: #{tpu_custom_call.1} parent=1 // loop_footer
      %s28 = sadd.s32 1, %s24
    $region7: #{tpu_custom_call.1} parent=1 // loop_footer_branch
      %23 = sbr.rel target = $region3
    $region8: #{tpu_custom_call.1} parent=1 // loop_exit
      _
    %766 = vsyncpa [#allocation3], 1
    %s767 = scalar_lea.sflag [#allocation3], 1
    %768 = vsyncpa %s767, 1
    %769 = vsyncpa [#allocation6], 1
    %s770 = scalar_lea.sflag [#allocation6], 1
    %771 = vsyncpa %s770, 1
    %772 = vsyncpa [#allocation4], 1
    %s773 = scalar_lea.sflag [#allocation4], 1
    %774 = vsyncpa %s773, 1
    %775 = vsyncpa [#allocation9], 1
    %s776 = scalar_lea.sflag [#allocation9], 1
    %777 = vsyncpa %s776, 1

</llo_original>
